<compile_context>
chip_gen: v6e
topology: v6e:2x2x1
jax: 0.10.0
libtpu: 0.0.40
codegen_flags: <defaults>
</compile_context>

<pallas_src>
import jax
import jax.numpy as jnp
from jax.experimental import pallas as pl
from jax.experimental.pallas import tpu as pltpu

C_SE = 10     # conv2d26 input channels
C_MID = 240   # conv2d26 output channels / conv2d27 input channels
C_OUT = 40    # conv2d27 output channels


def se_matmul_kernel(x79_ref, w1_ref, b1_ref, w2t_ref, x_ref, o_ref):
    # SE gate: sigmoid(x79 @ W1 + b1), computed as broadcast-mul + sublane
    # reduce + EUP exp (~10 vregs of work). Recomputed per grid step -- cheap,
    # fully hidden under the x-tile DMA, and correct under "parallel" megacore
    # sharding (a pl.when(step==0) init into scratch would not be).
    z = jnp.sum(x79_ref[...] * w1_ref[...], axis=0, keepdims=True) + b1_ref[...]
    gate = 1.0 / (1.0 + jnp.exp(-z))                              # (1, 240)
    w_scaled = w2t_ref[...] * gate                                # (40, 240)
    # (40, 240) @ (240, tile_n) -> (40, tile_n). tile_n is a multiple of 128
    # (or the full N), so the output store is lane-dense (unmasked vst).
    o_ref[...] = jnp.dot(
        w_scaled, x_ref[...], preferred_element_type=jnp.float32
    ).astype(o_ref.dtype)


def _default_num_tiles():
    # v7x has 2 TensorCores per chip: split the spatial axis so the "parallel"
    # grid dimension shards across them. Single tile elsewhere (v5e/v6e).
    try:
        d = jax.devices()[0]
        if getattr(d, "num_cores", 1) and getattr(d, "num_cores", 1) > 1:
            return 2
        kind = str(getattr(d, "device_kind", "")).lower()
        if "v7" in kind:
            return 2
    except Exception:
        pass
    return 1


def se_block(x76, x79, w1, b1, w2, *, num_tiles=None):
    """x76: [1, 240, H, W] NCHW, x79: [1, 10, 1, 1] NCHW -> [1, 40, H, W] NCHW."""
    B, C, H, W = x76.shape
    assert B == 1 and C == C_MID
    N = H * W

    if num_tiles is None:
        num_tiles = _default_num_tiles()

    # Tile selection: one big block by default; on v7x, split into blocks
    # rounded up to a multiple of 128 so every block stays lane-dense (the
    # partial last block is masked by Pallas and is harmless: each output
    # column depends only on its own input column).
    if num_tiles <= 1 or N <= 128:
        tile_n = N
    else:
        tile_n = min(((pl.cdiv(N, num_tiles) + 127) // 128) * 128, N)
    grid = (pl.cdiv(N, tile_n),)

    # Small, kernel-resident operands (constant index_map keeps them in VMEM
    # across grid steps).
    x79_col = x79.reshape(C_SE, 1)     # (10, 1)
    b1_row = b1.reshape(1, C_MID)      # (1, 240)
    w2t = w2.T                         # (40, 240) -- tiny parameter transpose

    # Channel-major view: free reshape of the contiguous NCHW buffer.
    x_cols = x76.reshape(C_MID, N)     # (240, N)

    cost = pl.CostEstimate(
        flops=2 * C_OUT * C_MID * N + 2 * C_SE * C_MID,
        transcendentals=C_MID * grid[0],
        bytes_accessed=4 * (C_MID * N + C_OUT * N
                            + C_SE + C_SE * C_MID + C_MID + C_OUT * C_MID),
    )

    out_cols = pl.pallas_call(
        se_matmul_kernel,
        out_shape=jax.ShapeDtypeStruct((C_OUT, N), x76.dtype),
        grid_spec=pltpu.PrefetchScalarGridSpec(
            num_scalar_prefetch=0,
            grid=grid,
            in_specs=[
                pl.BlockSpec((C_SE, 1), lambda i: (0, 0)),        # x79 column
                pl.BlockSpec((C_SE, C_MID), lambda i: (0, 0)),    # W1
                pl.BlockSpec((1, C_MID), lambda i: (0, 0)),       # b1
                pl.BlockSpec((C_OUT, C_MID), lambda i: (0, 0)),   # W2^T
                pl.BlockSpec((C_MID, tile_n), lambda i: (0, i)),  # x column tile
            ],
            out_specs=pl.BlockSpec((C_OUT, tile_n), lambda i: (0, i)),
        ),
        compiler_params=pltpu.CompilerParams(dimension_semantics=("parallel",)),
        cost_estimate=cost,
    )(x79_col, w1, b1_row, w2t, x_cols)

    return out_cols.reshape(1, C_OUT, H, W)


def reference(x76, x79, w1, b1, w2):
    # Pure-JAX reference of the PyTorch forward (1x1 convs as matmuls).
    gate = jax.nn.sigmoid(x79.reshape(1, C_SE) @ w1 + b1.reshape(1, C_MID))  # (1, 240)
    gated = x76 * gate.reshape(1, C_MID, 1, 1)                               # (1,240,H,W)
    return jnp.einsum("bchw,co->bohw", gated, w2)                            # (1,40,H,W)


if __name__ == "__main__":
    key = jax.random.PRNGKey(0)
    k1, k2, k3, k4, k5 = jax.random.split(key, 5)

    H = Wd = 16  # small spatial size (original module uses 56x56 -> N=3136)

    # Inputs (shapes implied by the module's forward).
    x76 = jax.random.normal(k1, (1, C_MID, H, Wd), dtype=jnp.float32)
    x79 = jax.random.normal(k2, (1, C_SE, 1, 1), dtype=jnp.float32)

    # Deterministic parameter init.
    # conv2d26: weight (240, 10, 1, 1) -> matmul form W1 (10, 240), bias b1 (240,)
    w1 = jax.random.normal(k3, (C_SE, C_MID), dtype=jnp.float32) * 0.1
    b1 = jax.random.normal(k4, (C_MID,), dtype=jnp.float32) * 0.1
    # conv2d27: weight (40, 240, 1, 1), no bias -> matmul form W2 (240, 40)
    w2 = jax.random.normal(k5, (C_MID, C_OUT), dtype=jnp.float32) * 0.1

    ref = reference(x76, x79, w1, b1, w2)

    # Default path: auto tile selection (single block on v5e/v6e, 2 on v7x).
    out = jax.block_until_ready(se_block(x76, x79, w1, b1, w2))
    assert out.shape == (1, C_OUT, H, Wd), out.shape
    err = float(jnp.max(jnp.abs(out - ref)))
    assert jnp.allclose(out, ref, atol=2e-4, rtol=2e-4), err

    # Multi-step path (exercises the pipelined / partial-block code on any chip).
    out2 = jax.block_until_ready(se_block(x76, x79, w1, b1, w2, num_tiles=2))
    err2 = float(jnp.max(jnp.abs(out2 - ref)))
    assert jnp.allclose(out2, ref, atol=2e-4, rtol=2e-4), err2

    print("KERNEL_OK")
</pallas_src>

<mosaic_0001>
module attributes {stable_mosaic.version = 11 : i64} {
  func.func @se_matmul_kernel(%arg0: i32, %arg1: memref<10x1xf32, #tpu.memory_space<vmem>>, %arg2: memref<10x240xf32, #tpu.memory_space<vmem>>, %arg3: memref<1x240xf32, #tpu.memory_space<vmem>>, %arg4: memref<40x240xf32, #tpu.memory_space<vmem>>, %arg5: memref<240x256xf32, #tpu.memory_space<vmem>>, %arg6: memref<40x256xf32, #tpu.memory_space<vmem>>) attributes {dimension_semantics = [#tpu.dimension_semantics<parallel>], iteration_bounds = array<i64: 1>, scalar_prefetch = 0 : i64, scratch_operands = 0 : i64, tpu.core_type = #tpu.core_type<tc>, window_params = [{pipeline_mode = #tpu.pipeline_mode<synchronous>, transform_indices = @transform_0, window_bounds = array<i64: 10, 1>}, {pipeline_mode = #tpu.pipeline_mode<synchronous>, transform_indices = @transform_1, window_bounds = array<i64: 10, 240>}, {pipeline_mode = #tpu.pipeline_mode<synchronous>, transform_indices = @transform_2, window_bounds = array<i64: 1, 240>}, {pipeline_mode = #tpu.pipeline_mode<synchronous>, transform_indices = @transform_3, window_bounds = array<i64: 40, 240>}, {transform_indices = @transform_4, window_bounds = array<i64: 240, 256>}, {transform_indices = @transform_5, window_bounds = array<i64: 40, 256>}]} {
    %c0 = arith.constant 0 : index
    %c0_0 = arith.constant 0 : index
    %0 = vector.load %arg1[%c0, %c0_0] : memref<10x1xf32, #tpu.memory_space<vmem>>, vector<10x1xf32>
    %c0_1 = arith.constant 0 : index
    %c0_2 = arith.constant 0 : index
    %1 = vector.load %arg2[%c0_1, %c0_2] : memref<10x240xf32, #tpu.memory_space<vmem>>, vector<10x240xf32>
    %2 = vector.broadcast %0 : vector<10x1xf32> to vector<10x240xf32>
    %3 = arith.mulf %2, %1 : vector<10x240xf32>
    %cst = arith.constant dense<0.000000e+00> : vector<240xf32>
    %4 = vector.multi_reduction <add>, %3, %cst [0] : vector<10x240xf32> to vector<240xf32>
    %5 = vector.shape_cast %4 : vector<240xf32> to vector<1x240xf32>
    %c0_3 = arith.constant 0 : index
    %c0_4 = arith.constant 0 : index
    %6 = vector.load %arg3[%c0_3, %c0_4] : memref<1x240xf32, #tpu.memory_space<vmem>>, vector<1x240xf32>
    %7 = arith.addf %5, %6 : vector<1x240xf32>
    %cst_5 = arith.constant 0.000000e+00 : f32
    %8 = vector.broadcast %cst_5 : f32 to vector<1x240xf32>
    %9 = arith.subf %8, %7 : vector<1x240xf32>
    %10 = math.exp %9 : vector<1x240xf32>
    %cst_6 = arith.constant 1.000000e+00 : f32
    %11 = vector.broadcast %cst_6 : f32 to vector<1x240xf32>
    %12 = arith.addf %11, %10 : vector<1x240xf32>
    %cst_7 = arith.constant 1.000000e+00 : f32
    %13 = vector.broadcast %cst_7 : f32 to vector<1x240xf32>
    %14 = arith.divf %13, %12 : vector<1x240xf32>
    %c0_8 = arith.constant 0 : index
    %c0_9 = arith.constant 0 : index
    %15 = vector.load %arg4[%c0_8, %c0_9] : memref<40x240xf32, #tpu.memory_space<vmem>>, vector<40x240xf32>
    %16 = vector.broadcast %14 : vector<1x240xf32> to vector<40x240xf32>
    %17 = arith.mulf %15, %16 : vector<40x240xf32>
    %c0_10 = arith.constant 0 : index
    %c0_11 = arith.constant 0 : index
    %18 = vector.load %arg5[%c0_10, %c0_11] : memref<240x256xf32, #tpu.memory_space<vmem>>, vector<240x256xf32>
    %cst_12 = arith.constant dense<0.000000e+00> : vector<40x256xf32>
    %19 = tpu.matmul %17, %18, %cst_12 {dimension_numbers = #tpu.dot_dimension_numbers<[1], [0], [0], [1], [0, 0, 1, 1], [], []>} : vector<40x240xf32>, vector<240x256xf32>, vector<40x256xf32> -> vector<40x256xf32>
    %c0_13 = arith.constant 0 : index
    %c0_14 = arith.constant 0 : index
    %20 = vector.load %arg6[%c0_13, %c0_14] : memref<40x256xf32, #tpu.memory_space<vmem>>, vector<40x256xf32>
    tpu.vector_store %arg6[%c0_13, %c0_14], %19 {strides = array<i32>} : memref<40x256xf32, #tpu.memory_space<vmem>>, vector<40x256xf32>,
    return
  }
  func.func @transform_0(%arg0: i32) -> (i32, i32) {
    %c0_i32 = arith.constant 0 : i32
    %c0_i32_0 = arith.constant 0 : i32
    %c0_i32_1 = arith.constant 0 : i32
    return %c0_i32, %c0_i32_0 : i32, i32
  }
  func.func @transform_1(%arg0: i32) -> (i32, i32) {
    %c0_i32 = arith.constant 0 : i32
    %c0_i32_0 = arith.constant 0 : i32
    %c0_i32_1 = arith.constant 0 : i32
    return %c0_i32, %c0_i32_0 : i32, i32
  }
  func.func @transform_2(%arg0: i32) -> (i32, i32) {
    %c0_i32 = arith.constant 0 : i32
    %c0_i32_0 = arith.constant 0 : i32
    %c0_i32_1 = arith.constant 0 : i32
    return %c0_i32, %c0_i32_0 : i32, i32
  }
  func.func @transform_3(%arg0: i32) -> (i32, i32) {
    %c0_i32 = arith.constant 0 : i32
    %c0_i32_0 = arith.constant 0 : i32
    %c0_i32_1 = arith.constant 0 : i32
    return %c0_i32, %c0_i32_0 : i32, i32
  }
  func.func @transform_4(%arg0: i32) -> (i32, i32) {
    %c0_i32 = arith.constant 0 : i32
    %c0_i32_0 = arith.constant 0 : i32
    return %c0_i32, %arg0 : i32, i32
  }
  func.func @transform_5(%arg0: i32) -> (i32, i32) {
    %c0_i32 = arith.constant 0 : i32
    %c0_i32_0 = arith.constant 0 : i32
    return %c0_i32, %arg0 : i32, i32
  }
}

</mosaic_0001>

<llo_original>
// kernel: tpu_custom_call.1
$region0: #{tpu_custom_call.1}
  #allocation0 [shape = 'u32[]', space=smem, size = 0x4, offset = 0x4, fixed_abs, tag = 'smem constant byte address 0x4 - core index']
  #allocation1 [shape = 'u32[144,128]{1,0:T(1,128)}', space=vmem, size = 0x12000, scoped, tag = 'internal scratch']
  %s0 = inlined_call_operand.vmem [shape: f32[10,1], index: 0, kind: input, shape index: {}]
  %s1 = inlined_call_operand.hbm [shape: f32[10,240], index: 1, kind: input, shape index: {}]
  %s2 = inlined_call_operand.vmem [shape: f32[1,240], index: 2, kind: input, shape index: {}]
  %s3 = inlined_call_operand.hbm [shape: f32[40,240], index: 3, kind: input, shape index: {}]
  %s4 = inlined_call_operand.hbm [shape: f32[240,256], index: 4, kind: input, shape index: {}]
  %s5 = inlined_call_operand.hbm [shape: f32[40,256], index: 5, kind: output, shape index: {}]
  %s6 = sld [smem:[#allocation0]]
  $region42: #{tpu_custom_call.1} parent=0
    _
  %s8 = ssub.s32 1, %s6
  %s9 = scalar_select 0, %s8, %s6
  $region1: #{tpu_custom_call.1} parent=0
    #allocation2 [shape = 'u8[16384]{0}', space=vmem, size = 0x4000, scoped, tag = 'input window, operand 1, single buffered']
    #allocation3 [shape = 's32[1]{0}', space=sflag, size = 0x4, scoped, tag = 'scoped memory for tpu_custom_call.1']
    #allocation4 [shape = 's32[1]{0}', space=sflag, size = 0x4, scoped, tag = 'scoped memory for tpu_custom_call.1']
    #allocation5 [shape = 'u8[40960]{0}', space=vmem, size = 0xa000, scoped, tag = 'input window, operand 3, single buffered']
    #allocation6 [shape = 's32[1]{0}', space=sflag, size = 0x4, scoped, tag = 'scoped memory for tpu_custom_call.1']
    #allocation7 [shape = 'u8[245760]{0}', space=vmem, size = 0x3c000, scoped, tag = 'input window, operand 4, single buffered']
    #allocation8 [shape = 'u8[40960]{0}', space=vmem, size = 0xa000, scoped, tag = 'output window, operand 0, single buffered']
    %10 = vsyncpa [#allocation3], 0
    %11 = vsyncpa [#allocation6], 0
    %12 = vsyncpa [#allocation4], 0
    // Predicated region
    $region2: #{tpu_custom_call.1} parent=1 // pred_check
      _
    $region3: #{tpu_custom_call.1} parent=1 // pred_check_branch
      %14 = sbr.rel (0) target = $region5
    $region4: #{tpu_custom_call.1} parent=1 // pred_region
      _
    $region5: #{tpu_custom_call.1} parent=1 // pred_fallthru
      _
    // Predicated region
    $region6: #{tpu_custom_call.1} parent=1 // pred_check
      _
    $region7: #{tpu_custom_call.1} parent=1 // pred_check_branch
      %16 = sbr.rel (0) target = $region9
    $region8: #{tpu_custom_call.1} parent=1 // pred_region
      %s18 = ssub.s32 512, 512
      %19 = vsyncadd [#allocation3], %s18
      %s20 = sshll.u32 [#allocation2], 4
      %s21 = int_to_ptr.vmem [resolvable:$true] %s20
      %26 = dma.hbm_to_vmem [thread:$0]  %s1, 512, %s21, [#allocation3], 256, 256, 16
    $region9: #{tpu_custom_call.1} parent=1 // pred_fallthru
      _
    // Predicated region
    $region10: #{tpu_custom_call.1} parent=1 // pred_check
      _
    $region11: #{tpu_custom_call.1} parent=1 // pred_check_branch
      %28 = sbr.rel (0) target = $region13
    $region12: #{tpu_custom_call.1} parent=1 // pred_region
      _
    $region13: #{tpu_custom_call.1} parent=1 // pred_fallthru
      _
    // Predicated region
    $region14: #{tpu_custom_call.1} parent=1 // pred_check
      _
    $region15: #{tpu_custom_call.1} parent=1 // pred_check_branch
      %30 = sbr.rel (0) target = $region17
    $region16: #{tpu_custom_call.1} parent=1 // pred_region
      %s32 = ssub.s32 1280, 1280
      %33 = vsyncadd [#allocation6], %s32
      %s34 = sshll.u32 [#allocation5], 4
      %s35 = int_to_ptr.vmem [resolvable:$true] %s34
      %40 = dma.hbm_to_vmem [thread:$0]  %s3, 1280, %s35, [#allocation6], 256, 256, 16
    $region17: #{tpu_custom_call.1} parent=1 // pred_fallthru
      _
    // Predicated region
    $region18: #{tpu_custom_call.1} parent=1 // pred_check
      _
    $region19: #{tpu_custom_call.1} parent=1 // pred_check_branch
      %42 = sbr.rel (0) target = $region21
    $region20: #{tpu_custom_call.1} parent=1 // pred_region
      %s44 = ssub.s32 7680, 7680
      %45 = vsyncadd [#allocation6], %s44
      %s46 = sshll.u32 [#allocation7], 4
      %s47 = int_to_ptr.vmem [resolvable:$true] %s46
      %52 = dma.hbm_to_vmem [thread:$0]  %s4, 7680, %s47, [#allocation6], 256, 256, 16
    $region21: #{tpu_custom_call.1} parent=1 // pred_fallthru
      _
    // Predicated region
    $region22: #{tpu_custom_call.1} parent=1 // pred_check
      _
    $region23: #{tpu_custom_call.1} parent=1 // pred_check_branch
      %54 = sbr.rel (0) target = $region25
    $region24: #{tpu_custom_call.1} parent=1 // pred_region
      %55 = dma.done [#allocation3], 512
    $region25: #{tpu_custom_call.1} parent=1 // pred_fallthru
      _
    // Predicated region
    $region26: #{tpu_custom_call.1} parent=1 // pred_check
      _
    $region27: #{tpu_custom_call.1} parent=1 // pred_check_branch
      %57 = sbr.rel (0) target = $region29
    $region28: #{tpu_custom_call.1} parent=1 // pred_region
      %58 = dma.done [#allocation6], 1280
    $region29: #{tpu_custom_call.1} parent=1 // pred_fallthru
      _
    // Predicated region
    $region30: #{tpu_custom_call.1} parent=1 // pred_check
      _
    $region31: #{tpu_custom_call.1} parent=1 // pred_check_branch
      %60 = sbr.rel (0) target = $region33
    $region32: #{tpu_custom_call.1} parent=1 // pred_region
      %61 = dma.done [#allocation6], 7680
    $region33: #{tpu_custom_call.1} parent=1 // pred_fallthru
      _
    %v62 = vld [vmem:[%s0] sm:$0xff]
    %v63 = vld [vmem:[%s0 + $0x8] sm:$0x3]
    %v64 = vld [vmem:[#allocation2] sm:$0xff]
    %v65 = vld [vmem:[#allocation2 + $0x8] sm:$0xff]
    %v66 = vld [vmem:[#allocation2 + $0x10] sm:$0x3]
    %v67 = vld [vmem:[#allocation2 + $0x18] sm:$0x3]
    %69 = vset.pattern.permute.xlu0 0
    %70 = vperm.xlu0 %69, %v62
    %v71 = vpop.permute.xlu0 %70
    %74 = vset.pattern.permute.xlu0 0
    %75 = vperm.xlu0 %74, %v63
    %v76 = vpop.permute.xlu0 %75
    %v78 = vmul.f32 %v71, %v64
    %v79 = vmul.f32 %v71, %v65
    %v80 = vmul.f32 %v76, %v66
    %v81 = vmul.f32 %v76, %v67
    %vm82 = vcmask 1041408
    %v83 = vsel %vm82, %v80, 0.0
    %v84 = vadd.f32 %v78, %v83
    %v85 = vrot.slane %v84, 4
    %v86 = vadd.f32 %v84, %v85
    %v87 = vrot.slane %v86, 2
    %v88 = vadd.f32 %v86, %v87
    %v89 = vrot.slane %v88, 1
    %v90 = vadd.f32 %v88, %v89
    %vm91 = vcmask 916480
    %v92 = vsel %vm91, %v79, 0.0
    %vm93 = vcmask 910336
    %v94 = vsel %vm93, %v81, 0.0
    %v95 = vadd.f32 %v92, %v94
    %v96 = vrot.slane %v95, 4
    %v97 = vadd.f32 %v95, %v96
    %v98 = vrot.slane %v97, 2
    %v99 = vadd.f32 %v97, %v98
    %v100 = vrot.slane %v99, 1
    %v101 = vadd.f32 %v99, %v100
    %v102 = vld [vmem:[%s2] sm:$0x3]
    %v104 = vlaneseq
    %v105 = vshrl.u32 %v104, 7
    %v106 = vsub.s32 0, %v105
    %v107 = vrot.slane %v102, %v106
    %v108 = vlaneseq
    %v109 = vshrl.u32 %v108, 7
    %v110 = vsub.s32 1, %v109
    %v111 = vrot.slane %v102, %v110
    %v114 = vadd.f32 %v90, %v107
    %v115 = vadd.f32 %v101, %v111
    %v116 = vsub.f32 0.0, %v114
    %v117 = vsub.f32 0.0, %v115
    %v118 = vmul.f32 %v116, 1.442695
    %v119 = vpow.pop %v118
    %v120 = vmul.f32 %v117, 1.442695
    %v121 = vpow.pop %v120
    %v122 = vadd.f32 %v119, 1.0
    %v123 = vadd.f32 %v121, 1.0
    %v124 = vrcp.pop %v122
    %v125 = vmul.f32 1.0, %v124
    %v126 = vrcp.pop %v123
    %v127 = vmul.f32 1.0, %v126
    %v128 = vld [vmem:[#allocation5] sm:$0xff]
    %v129 = vld [vmem:[#allocation5 + $0x8] sm:$0xff]
    %v130 = vld [vmem:[#allocation5 + $0x10] sm:$0xff]
    %v131 = vld [vmem:[#allocation5 + $0x18] sm:$0xff]
    %v132 = vld [vmem:[#allocation5 + $0x20] sm:$0xff]
    %v133 = vld [vmem:[#allocation5 + $0x28] sm:$0xff]
    %v134 = vld [vmem:[#allocation5 + $0x30] sm:$0xff]
    %v135 = vld [vmem:[#allocation5 + $0x38] sm:$0xff]
    %v136 = vld [vmem:[#allocation5 + $0x40] sm:$0xff]
    %v137 = vld [vmem:[#allocation5 + $0x48] sm:$0xff]
    %v138 = vlaneseq
    %v139 = vshrl.u32 %v138, 7
    %v140 = vsub.s32 0, %v139
    %v141 = vrot.slane %v125, %v140
    %v142 = vlaneseq
    %v143 = vshrl.u32 %v142, 7
    %v144 = vsub.s32 0, %v143
    %v145 = vrot.slane %v127, %v144
    %v146 = vmul.f32 %v128, %v141
    %v147 = vmul.f32 %v129, %v145
    %v148 = vmul.f32 %v130, %v141
    %v149 = vmul.f32 %v131, %v145
    %v150 = vmul.f32 %v132, %v141
    %v151 = vmul.f32 %v133, %v145
    %v152 = vmul.f32 %v134, %v141
    %v153 = vmul.f32 %v135, %v145
    %v154 = vmul.f32 %v136, %v141
    %v155 = vmul.f32 %v137, %v145
    %v156 = vld [vmem:[#allocation7] sm:$0xff]
    %v157 = vld [vmem:[#allocation7 + $0x8] sm:$0xff]
    %v158 = vld [vmem:[#allocation7 + $0x10] sm:$0xff]
    %v159 = vld [vmem:[#allocation7 + $0x18] sm:$0xff]
    %v160 = vld [vmem:[#allocation7 + $0x20] sm:$0xff]
    %v161 = vld [vmem:[#allocation7 + $0x28] sm:$0xff]
    %v162 = vld [vmem:[#allocation7 + $0x30] sm:$0xff]
    %v163 = vld [vmem:[#allocation7 + $0x38] sm:$0xff]
    %v164 = vld [vmem:[#allocation7 + $0x40] sm:$0xff]
    %v165 = vld [vmem:[#allocation7 + $0x48] sm:$0xff]
    %v166 = vld [vmem:[#allocation7 + $0x50] sm:$0xff]
    %v167 = vld [vmem:[#allocation7 + $0x58] sm:$0xff]
    %v168 = vld [vmem:[#allocation7 + $0x60] sm:$0xff]
    %v169 = vld [vmem:[#allocation7 + $0x68] sm:$0xff]
    %v170 = vld [vmem:[#allocation7 + $0x70] sm:$0xff]
    %v171 = vld [vmem:[#allocation7 + $0x78] sm:$0xff]
    %v172 = vld [vmem:[#allocation7 + $0x80] sm:$0xff]
    %v173 = vld [vmem:[#allocation7 + $0x88] sm:$0xff]
    %v174 = vld [vmem:[#allocation7 + $0x90] sm:$0xff]
    %v175 = vld [vmem:[#allocation7 + $0x98] sm:$0xff]
    %v176 = vld [vmem:[#allocation7 + $0xa0] sm:$0xff]
    %v177 = vld [vmem:[#allocation7 + $0xa8] sm:$0xff]
    %v178 = vld [vmem:[#allocation7 + $0xb0] sm:$0xff]
    %v179 = vld [vmem:[#allocation7 + $0xb8] sm:$0xff]
    %v180 = vld [vmem:[#allocation7 + $0xc0] sm:$0xff]
    %v181 = vld [vmem:[#allocation7 + $0xc8] sm:$0xff]
    %v182 = vld [vmem:[#allocation7 + $0xd0] sm:$0xff]
    %v183 = vld [vmem:[#allocation7 + $0xd8] sm:$0xff]
    %v184 = vld [vmem:[#allocation7 + $0xe0] sm:$0xff]
    %v185 = vld [vmem:[#allocation7 + $0xe8] sm:$0xff]
    %v186 = vld [vmem:[#allocation7 + $0xf0] sm:$0xff]
    %v187 = vld [vmem:[#allocation7 + $0xf8] sm:$0xff]
    %v188 = vld [vmem:[#allocation7 + $0x100] sm:$0xff]
    %v189 = vld [vmem:[#allocation7 + $0x108] sm:$0xff]
    %v190 = vld [vmem:[#allocation7 + $0x110] sm:$0xff]
    %v191 = vld [vmem:[#allocation7 + $0x118] sm:$0xff]
    %v192 = vld [vmem:[#allocation7 + $0x120] sm:$0xff]
    %v193 = vld [vmem:[#allocation7 + $0x128] sm:$0xff]
    %v194 = vld [vmem:[#allocation7 + $0x130] sm:$0xff]
    %v195 = vld [vmem:[#allocation7 + $0x138] sm:$0xff]
    %v196 = vld [vmem:[#allocation7 + $0x140] sm:$0xff]
    %v197 = vld [vmem:[#allocation7 + $0x148] sm:$0xff]
    %v198 = vld [vmem:[#allocation7 + $0x150] sm:$0xff]
    %v199 = vld [vmem:[#allocation7 + $0x158] sm:$0xff]
    %v200 = vld [vmem:[#allocation7 + $0x160] sm:$0xff]
    %v201 = vld [vmem:[#allocation7 + $0x168] sm:$0xff]
    %v202 = vld [vmem:[#allocation7 + $0x170] sm:$0xff]
    %v203 = vld [vmem:[#allocation7 + $0x178] sm:$0xff]
    %v204 = vld [vmem:[#allocation7 + $0x180] sm:$0xff]
    %v205 = vld [vmem:[#allocation7 + $0x188] sm:$0xff]
    %v206 = vld [vmem:[#allocation7 + $0x190] sm:$0xff]
    %v207 = vld [vmem:[#allocation7 + $0x198] sm:$0xff]
    %v208 = vld [vmem:[#allocation7 + $0x1a0] sm:$0xff]
    %v209 = vld [vmem:[#allocation7 + $0x1a8] sm:$0xff]
    %v210 = vld [vmem:[#allocation7 + $0x1b0] sm:$0xff]
    %v211 = vld [vmem:[#allocation7 + $0x1b8] sm:$0xff]
    %v212 = vld [vmem:[#allocation7 + $0x1c0] sm:$0xff]
    %v213 = vld [vmem:[#allocation7 + $0x1c8] sm:$0xff]
    %v214 = vld [vmem:[#allocation7 + $0x1d0] sm:$0xff]
    %v215 = vld [vmem:[#allocation7 + $0x1d8] sm:$0xff]
    %v217 = vsel %vm91, %v147, 0
    %v220 = vsel %vm91, %v149, 0
    %v223 = vsel %vm91, %v151, 0
    %v226 = vsel %vm91, %v153, 0
    %v229 = vsel %vm91, %v155, 0
    %231 = vmatprep.subr.mxu0 %v187
    %232 = vmatpush1.msra.mxu0 %v186
    %233 = vmatprep.subr.mxu0 %v185
    %234 = vmatpush1.msra.mxu0 %v184
    %235 = vmatprep.subr.mxu0 %v183
    %236 = vmatpush1.msra.mxu0 %v182
    %237 = vmatprep.subr.mxu0 %v181
    %238 = vmatpush1.msra.mxu0 %v180
    %239 = vmatprep.subr.mxu0 %v179
    %240 = vmatpush1.msra.mxu0 %v178
    %241 = vmatprep.subr.mxu0 %v177
    %242 = vmatpush1.msra.mxu0 %v176
    %243 = vmatprep.subr.mxu0 %v175
    %244 = vmatpush1.msra.mxu0 %v174
    %245 = vmatprep.subr.mxu0 %v173
    %246 = vmatpush1.msra.mxu0 %v172
    %247 = vmatprep.subr.mxu0 %v171
    %248 = vmatpush1.msra.mxu0 %v170
    %249 = vmatprep.subr.mxu0 %v169
    %250 = vmatpush1.msra.mxu0 %v168
    %251 = vmatprep.subr.mxu0 %v167
    %252 = vmatpush1.msra.mxu0 %v166
    %253 = vmatprep.subr.mxu0 %v165
    %254 = vmatpush1.msra.mxu0 %v164
    %255 = vmatprep.subr.mxu0 %v163
    %256 = vmatpush1.msra.mxu0 %v162
    %257 = vmatprep.subr.mxu0 %v161
    %258 = vmatpush1.msra.mxu0 %v160
    %259 = vmatprep.subr.mxu0 %v159
    %260 = vmatpush1.msra.mxu0 %v158
    %261 = vmatprep.subr.mxu0 %v157
    %262 = vmatpush1.msra.mxu0 %v156
    %263 = vmatprep.subr.mxu0 0.0
    %264 = vmatpush2.msra.mxu0 0.0
    %265 = vmatprep.subr.mxu0 0.0
    %266 = vmatpush2.msra.mxu0 0.0
    %267 = vmatprep.subr.mxu0 %v215
    %268 = vmatpush2.msra.mxu0 %v214
    %269 = vmatprep.subr.mxu0 %v213
    %270 = vmatpush2.msra.mxu0 %v212
    %271 = vmatprep.subr.mxu0 %v211
    %272 = vmatpush2.msra.mxu0 %v210
    %273 = vmatprep.subr.mxu0 %v209
    %274 = vmatpush2.msra.mxu0 %v208
    %275 = vmatprep.subr.mxu0 %v207
    %276 = vmatpush2.msra.mxu0 %v206
    %277 = vmatprep.subr.mxu0 %v205
    %278 = vmatpush2.msra.mxu0 %v204
    %279 = vmatprep.subr.mxu0 %v203
    %280 = vmatpush2.msra.mxu0 %v202
    %281 = vmatprep.subr.mxu0 %v201
    %282 = vmatpush2.msra.mxu0 %v200
    %283 = vmatprep.subr.mxu0 %v199
    %284 = vmatpush2.msra.mxu0 %v198
    %285 = vmatprep.subr.mxu0 %v197
    %286 = vmatpush2.msra.mxu0 %v196
    %287 = vmatprep.subr.mxu0 %v195
    %288 = vmatpush2.msra.mxu0 %v194
    %289 = vmatprep.subr.mxu0 %v193
    %290 = vmatpush2.msra.mxu0 %v192
    %291 = vmatprep.subr.mxu0 %v191
    %292 = vmatpush2.msra.mxu0 %v190
    %293 = vmatprep.subr.mxu0 %v189
    %294 = vmatpush2.msra.mxu0 %v188
    %295 = vmatprep.mubr.f32.mxu0 %v217
    %296 = vmatmul.mubr.f32.gmra.mxu0 %v146
    %v297 = vpop.f32.mrf.mxu0
    %v298 = vadd.f32 0.0, %v297
    %v299 = vpop.f32.mrf.mxu0
    %v300 = vadd.f32 0.0, %v299
    %301 = vmatprep.mubr.f32.mxu0 %v220
    %302 = vmatmul.mubr.f32.gmra.mxu0 %v148
    %v303 = vpop.f32.mrf.mxu0
    %v304 = vadd.f32 0.0, %v303
    %v305 = vpop.f32.mrf.mxu0
    %v306 = vadd.f32 0.0, %v305
    %307 = vmatprep.mubr.f32.mxu0 %v223
    %308 = vmatmul.mubr.f32.gmra.mxu0 %v150
    %v309 = vpop.f32.mrf.mxu0
    %v310 = vadd.f32 0.0, %v309
    %v311 = vpop.f32.mrf.mxu0
    %v312 = vadd.f32 0.0, %v311
    %313 = vmatprep.mubr.f32.mxu0 %v226
    %314 = vmatmul.mubr.f32.gmra.mxu0 %v152
    %v315 = vpop.f32.mrf.mxu0
    %v316 = vadd.f32 0.0, %v315
    %v317 = vpop.f32.mrf.mxu0
    %v318 = vadd.f32 0.0, %v317
    %319 = vmatprep.mubr.f32.mxu0 %v229
    %320 = vmatmul.mubr.f32.gmra.mxu0 %v154
    %v321 = vpop.f32.mrf.mxu0
    %v322 = vadd.f32 0.0, %v321
    %v323 = vpop.f32.mrf.mxu0
    %v324 = vadd.f32 0.0, %v323
    %325 = vdwg.mxu0
    %326 = vst [vmem:[#allocation8] sm:$0xff] %v298
    %327 = vst [vmem:[#allocation8 + $0x8] sm:$0xff] %v300
    %328 = vst [vmem:[#allocation8 + $0x10] sm:$0xff] %v304
    %329 = vst [vmem:[#allocation8 + $0x18] sm:$0xff] %v306
    %330 = vst [vmem:[#allocation8 + $0x20] sm:$0xff] %v310
    %331 = vst [vmem:[#allocation8 + $0x28] sm:$0xff] %v312
    %332 = vst [vmem:[#allocation8 + $0x30] sm:$0xff] %v316
    %333 = vst [vmem:[#allocation8 + $0x38] sm:$0xff] %v318
    %334 = vst [vmem:[#allocation8 + $0x40] sm:$0xff] %v322
    %335 = vst [vmem:[#allocation8 + $0x48] sm:$0xff] %v324
    // Predicated region
    $region34: #{tpu_custom_call.1} parent=1 // pred_check
      _
    $region35: #{tpu_custom_call.1} parent=1 // pred_check_branch
      %337 = sbr.rel (0) target = $region37
    $region36: #{tpu_custom_call.1} parent=1 // pred_region
      %s339 = ssub.s32 1280, 1280
      %340 = vsyncadd [#allocation4], %s339
      %s341 = sshll.u32 [#allocation8], 4
      %s342 = int_to_ptr.vmem [resolvable:$true] %s341
      %347 = dma.vmem_to_hbm [thread:$0]  %s342, 1280, %s5, [#allocation4], 256, 256, 16
    $region37: #{tpu_custom_call.1} parent=1 // pred_fallthru
      _
    // Predicated region
    $region38: #{tpu_custom_call.1} parent=1 // pred_check
      _
    $region39: #{tpu_custom_call.1} parent=1 // pred_check_branch
      %349 = sbr.rel (0) target = $region41
    $region40: #{tpu_custom_call.1} parent=1 // pred_region
      %350 = dma.done [#allocation4], 1280
    $region41: #{tpu_custom_call.1} parent=1 // pred_fallthru
      _
    %351 = vsyncpa [#allocation3], 1
    %352 = vsyncpa [#allocation6], 1
    %353 = vsyncpa [#allocation4], 1

</llo_original>
